<compile_context>
chip_gen: v7x
topology: tpu7x:2x2x1
jax: 0.10.0
libtpu: 0.0.40
codegen_flags: <defaults>
</compile_context>

<pallas_src>
import math

import jax
import jax.numpy as jnp
from jax.experimental import pallas as pl
from jax.experimental.pallas import tpu as pltpu


IN_FEATURES = 2
OUT_FEATURES = 1
_SUBLANE = 8


# ------------------------- Pallas kernel -------------------------

def _fma_kernel(w_ref, b_ref, x_ref, o_ref):
    # w_ref: SMEM (2,), b_ref: SMEM (1,)  -- scalar reads
    # x_ref: VMEM (bm, 2), o_ref: VMEM (bm, 1)
    x = x_ref[...]
    y = x[:, 0:1] * w_ref[0] + x[:, 1:2] * w_ref[1] + b_ref[0]
    o_ref[...] = y.astype(o_ref.dtype)


def linear_forward(x, params, *, tm=2048):
    """y = x @ W^T + b (PyTorch nn.Linear(2, 1) semantics).  x: (..., 2) -> (..., 1)."""
    w = params["w"].astype(jnp.float32)          # (1, 2)
    b = params["b"].astype(jnp.float32)          # (1,)
    lead = x.shape[:-1]
    assert x.shape[-1] == IN_FEATURES
    x2 = x.reshape(-1, IN_FEATURES).astype(jnp.float32)
    M = x2.shape[0]

    # Row tile: clamp to a multiple of 8 sublanes; a batch that fits in one tile is
    # handled as a single full-array block (no (8,128) constraint, no padding at all).
    tm = max(_SUBLANE, (tm // _SUBLANE) * _SUBLANE)
    bm = M if M <= tm else tm
    grid_m = pl.cdiv(M, bm)

    w_sc = w.reshape(IN_FEATURES)                # (2,) lives in SMEM
    b_sc = b.reshape(OUT_FEATURES)               # (1,) lives in SMEM

    out = pl.pallas_call(
        _fma_kernel,
        out_shape=jax.ShapeDtypeStruct((M, OUT_FEATURES), jnp.float32),
        grid_spec=pltpu.PrefetchScalarGridSpec(
            num_scalar_prefetch=0,
            grid=(grid_m,),
            in_specs=[
                pl.BlockSpec(memory_space=pltpu.MemorySpace.SMEM),     # w scalars
                pl.BlockSpec(memory_space=pltpu.MemorySpace.SMEM),     # b scalar
                pl.BlockSpec((bm, IN_FEATURES), lambda i: (i, 0)),     # x row block
            ],
            out_specs=pl.BlockSpec((bm, OUT_FEATURES), lambda i: (i, 0)),
        ),
        compiler_params=pltpu.CompilerParams(
            dimension_semantics=("parallel",),    # v7x: shard row blocks over both TCs
        ),
    )(w_sc, b_sc, x2)
    return out.reshape(*lead, OUT_FEATURES)


# ------------------------- parameters -------------------------

def init_linear_params(key, in_features=IN_FEATURES, out_features=OUT_FEATURES):
    """Deterministic synthetic nn.Linear(in, out) params (PyTorch default init range)."""
    k_w, k_b = jax.random.split(key)
    bound = 1.0 / math.sqrt(in_features)
    w = jax.random.uniform(k_w, (out_features, in_features), jnp.float32, -bound, bound)
    b = jax.random.uniform(k_b, (out_features,), jnp.float32, -bound, bound)
    return {"w": w, "b": b}


# ------------------------- main -------------------------

if __name__ == "__main__":
    key = jax.random.PRNGKey(0)
    k_params, k_x1, k_x2 = jax.random.split(key, 3)
    params = init_linear_params(k_params)

    # Case 1: tiny batch (the module's typical regime) -> single full-array block,
    # single custom call, no pad/slice ops.
    batch = 4
    x = jax.random.normal(k_x1, (batch, IN_FEATURES), jnp.float32)
    fwd = jax.jit(lambda xx: linear_forward(xx, params))
    y = jax.block_until_ready(fwd(x))
    y_ref = x @ params["w"].T + params["b"]
    assert y.shape == (batch, OUT_FEATURES), y.shape
    assert bool(jnp.all(jnp.isfinite(y)))
    assert bool(jnp.allclose(y, y_ref, atol=1e-5, rtol=1e-5)), (y, y_ref)

    # Case 2: multi-block grid with a ragged final row block (still small shapes)
    # to exercise the tiled path: bm=8, grid=3, last block partially out of bounds.
    batch2 = 20
    x2 = jax.random.normal(k_x2, (batch2, IN_FEATURES), jnp.float32)
    fwd2 = jax.jit(lambda xx: linear_forward(xx, params, tm=8))
    y2 = jax.block_until_ready(fwd2(x2))
    y2_ref = x2 @ params["w"].T + params["b"]
    assert y2.shape == (batch2, OUT_FEATURES), y2.shape
    assert bool(jnp.allclose(y2, y2_ref, atol=1e-5, rtol=1e-5)), (y2, y2_ref)

    print("KERNEL_OK")
</pallas_src>

<mosaic_0001>
module attributes {stable_mosaic.version = 11 : i64} {
  func.func @_fma_kernel(%arg0: i32, %arg1: memref<2xf32, #tpu.memory_space<smem>>, %arg2: memref<1xf32, #tpu.memory_space<smem>>, %arg3: memref<4x2xf32, #tpu.memory_space<vmem>>, %arg4: memref<4x1xf32, #tpu.memory_space<vmem>>) attributes {dimension_semantics = [#tpu.dimension_semantics<parallel>], iteration_bounds = array<i64: 1>, scalar_prefetch = 0 : i64, scratch_operands = 0 : i64, tpu.core_type = #tpu.core_type<tc>, window_params = [{transform_indices = @transform_0, window_bounds = array<i64: 2>}, {transform_indices = @transform_1, window_bounds = array<i64: 1>}, {transform_indices = @transform_2, window_bounds = array<i64: 4, 2>}, {transform_indices = @transform_3, window_bounds = array<i64: 4, 1>}]} {
    %c0 = arith.constant 0 : index
    %c0_0 = arith.constant 0 : index
    %0 = vector.load %arg3[%c0, %c0_0] : memref<4x2xf32, #tpu.memory_space<vmem>>, vector<4x2xf32>
    %1 = vector.extract_strided_slice %0 {offsets = [0, 0], sizes = [4, 1], strides = [1, 1]} : vector<4x2xf32> to vector<4x1xf32>
    %c0_1 = arith.constant 0 : index
    %2 = memref.load %arg1[%c0_1] : memref<2xf32, #tpu.memory_space<smem>>
    %3 = vector.broadcast %2 : f32 to vector<4x1xf32>
    %4 = arith.mulf %1, %3 : vector<4x1xf32>
    %5 = vector.extract_strided_slice %0 {offsets = [0, 1], sizes = [4, 1], strides = [1, 1]} : vector<4x2xf32> to vector<4x1xf32>
    %c1 = arith.constant 1 : index
    %6 = memref.load %arg1[%c1] : memref<2xf32, #tpu.memory_space<smem>>
    %7 = vector.broadcast %6 : f32 to vector<4x1xf32>
    %8 = arith.mulf %5, %7 : vector<4x1xf32>
    %9 = arith.addf %4, %8 : vector<4x1xf32>
    %c0_2 = arith.constant 0 : index
    %10 = memref.load %arg2[%c0_2] : memref<1xf32, #tpu.memory_space<smem>>
    %11 = vector.broadcast %10 : f32 to vector<4x1xf32>
    %12 = arith.addf %9, %11 : vector<4x1xf32>
    %c0_3 = arith.constant 0 : index
    %c0_4 = arith.constant 0 : index
    %13 = vector.load %arg4[%c0_3, %c0_4] : memref<4x1xf32, #tpu.memory_space<vmem>>, vector<4x1xf32>
    tpu.vector_store %arg4[%c0_3, %c0_4], %12 {strides = array<i32>} : memref<4x1xf32, #tpu.memory_space<vmem>>, vector<4x1xf32>,
    return
  }
  func.func @transform_0(%arg0: i32) -> i32 {
    %c0_i32 = arith.constant 0 : i32
    %c0_i32_0 = arith.constant 0 : i32
    return %c0_i32 : i32
  }
  func.func @transform_1(%arg0: i32) -> i32 {
    %c0_i32 = arith.constant 0 : i32
    %c0_i32_0 = arith.constant 0 : i32
    return %c0_i32 : i32
  }
  func.func @transform_2(%arg0: i32) -> (i32, i32) {
    %c0_i32 = arith.constant 0 : i32
    %c0_i32_0 = arith.constant 0 : i32
    return %arg0, %c0_i32 : i32, i32
  }
  func.func @transform_3(%arg0: i32) -> (i32, i32) {
    %c0_i32 = arith.constant 0 : i32
    %c0_i32_0 = arith.constant 0 : i32
    return %arg0, %c0_i32 : i32, i32
  }
}

</mosaic_0001>

<llo_original>
// kernel: _lambda_.1
$region0: #{_lambda_.1}
  #allocation0 [shape = 'u32[]', space=smem, size = 0x4, offset = 0x4, fixed_abs, tag = 'smem constant byte address 0x4 - core index']
  #allocation1 [shape = 'u32[144,128]{1,0:T(1,128)}', space=vmem, size = 0x12000, scoped, tag = 'internal scratch']
  #allocation2 [shape = 'f32[1]{0:T(128)S(6)}', space=smem, size = 0x200, scoped, tag = 'scoped memory for _lambda_.1']
  %s0 = inlined_call_operand.vmem [shape: f32[2], index: 0, kind: input, shape index: {}]
  %s1 = inlined_call_operand.<no memory space> [shape: f32[1], index: 1, kind: input, shape index: {}]
  %s2 = inlined_call_operand.vmem [shape: f32[4,2], index: 2, kind: input, shape index: {}]
  %s3 = inlined_call_operand.vmem [shape: f32[4,1], index: 3, kind: output, shape index: {}]
  %s4 = sld [smem:[#allocation0]]
  $region26: #{_lambda_.1} parent=0
    _
  %s6 = ssub.s32 1, %s4
  %s7 = scalar_select 0, %s6, %s4
  %8 = sst [smem:[#allocation2]] %s1
  $region1: #{_lambda_.1} parent=0
    #allocation3 [shape = 'u8[512]{0}', space=smem, size = 0x200, scoped, tag = 'input window, operand 0, single buffered']
    #allocation4 [shape = 's32[1]{0}', space=sflag, size = 0x4, scoped, tag = 'scoped memory for _lambda_.1']
    %9 = vsyncpa [#allocation4], 0
    // Predicated region
    $region2: #{_lambda_.1} parent=1 // pred_check
      _
    $region3: #{_lambda_.1} parent=1 // pred_check_branch
      %11 = sbr.rel (0) target = $region5
    $region4: #{_lambda_.1} parent=1 // pred_region
      %s13 = ssub.s32 16, 16
      %14 = vsyncadd [#allocation4], %s13
      %s16 = sshll.u32 %s0, 4
      %s17 = int_to_ptr.vmem [resolvable:$true] %s16
      %19 = dma.vmem_to_smem %s17, 16, [#allocation3], [#allocation4]
    $region5: #{_lambda_.1} parent=1 // pred_fallthru
      _
    // Predicated region
    $region6: #{_lambda_.1} parent=1 // pred_check
      _
    $region7: #{_lambda_.1} parent=1 // pred_check_branch
      %21 = sbr.rel (0) target = $region9
    $region8: #{_lambda_.1} parent=1 // pred_region
      _
    $region9: #{_lambda_.1} parent=1 // pred_fallthru
      _
    // Predicated region
    $region10: #{_lambda_.1} parent=1 // pred_check
      _
    $region11: #{_lambda_.1} parent=1 // pred_check_branch
      %23 = sbr.rel (0) target = $region13
    $region12: #{_lambda_.1} parent=1 // pred_region
      _
    $region13: #{_lambda_.1} parent=1 // pred_fallthru
      _
    // Predicated region
    $region14: #{_lambda_.1} parent=1 // pred_check
      _
    $region15: #{_lambda_.1} parent=1 // pred_check_branch
      %25 = sbr.rel (0) target = $region17
    $region16: #{_lambda_.1} parent=1 // pred_region
      %26 = dma.done [#allocation4], 16
    $region17: #{_lambda_.1} parent=1 // pred_fallthru
      _
    %27 = sfence
    %v28 = vld [vmem:[%s2] sm:$0xf]
    %s29 = sld [smem:[#allocation3]]
    %v30 = vstv %s29
    %v31 = vmul.f32 %v28, %v30
    %s32 = sld [smem:[#allocation3 + $0x1]]
    %v33 = vstv %s32
    %v34 = vmul.f32 %v28, %v33
    %36 = vrot.lane.b32.xlu0 %v34, 127
    %v37 = vpop.permute.xlu0 %36
    %v39 = vadd.f32 %v31, %v37
    %s40 = sld [smem:[#allocation2]]
    %v41 = vstv %s40
    %v42 = vadd.f32 %v39, %v41
    %vm43 = vcmask 3072
    %44 = vst.msk [vmem:[%s3] sm:$0xf] %vm43, %v42
    // Predicated region
    $region18: #{_lambda_.1} parent=1 // pred_check
      _
    $region19: #{_lambda_.1} parent=1 // pred_check_branch
      %46 = sbr.rel (0) target = $region21
    $region20: #{_lambda_.1} parent=1 // pred_region
      _
    $region21: #{_lambda_.1} parent=1 // pred_fallthru
      _
    // Predicated region
    $region22: #{_lambda_.1} parent=1 // pred_check
      _
    $region23: #{_lambda_.1} parent=1 // pred_check_branch
      %48 = sbr.rel (0) target = $region25
    $region24: #{_lambda_.1} parent=1 // pred_region
      _
    $region25: #{_lambda_.1} parent=1 // pred_fallthru
      _
    %49 = vsyncpa [#allocation4], 1

</llo_original>
